<compile_context>
chip_gen: v6e
topology: v6e:2x2x1
jax: 0.10.0
libtpu: 0.0.40
codegen_flags: <defaults>
</compile_context>

<pallas_src>
import functools
import math

import jax
import jax.numpy as jnp
from jax.experimental import pallas as pl
from jax.experimental.pallas import tpu as pltpu


def _round_up(x, m):
    return ((x + m - 1) // m) * m


def _device_kind():
    try:
        return jax.devices()[0].device_kind.lower()
    except Exception:
        return ""


def _vmem_limit_bytes():
    # v7x has 64 MiB VMEM per TensorCore -> stay under ~48 MiB.
    # v5e / v6e have 128 MiB -> 64 MiB scoped limit enables the larger tiles.
    if "v7" in _device_kind():
        return 48 * 1024 * 1024
    return 64 * 1024 * 1024


def _is_two_tc():
    return "v7" in _device_kind()  # v7x: 2 TensorCores per chip


def _choose_tiles(n):
    """Pick (tm, tk, n_p) with tm | n_p and tk | n_p.

    Small graphs: one full-size tile. Large graphs: tm in {256, 512} and a big
    reduction tile tk = 4*tm (1024/2048) to amortize per-step overhead and get
    near the HBM roofline.
    """
    n8 = _round_up(max(n, 8), 8)
    if n8 <= 512:
        tm = tk = n8
        n_p = n8
    else:
        tm = 512 if n8 >= 4096 else 256
        tk = min(4 * tm, _round_up(n8, tm))
        n_p = _round_up(n8, tk)
    # v7x megacore: make sure both TensorCores get at least one row tile.
    if _is_two_tc() and (n_p // tm) < 2 and n_p % 32 == 0 and n_p >= 32:
        tm = n_p // 2
    return tm, tk, n_p


def _support_fits_resident(n_p, f_out, tm, tk, limit_bytes):
    resident = n_p * f_out * 2            # bf16 support, fetched once
    a_bufs = 2 * tm * tk * 2              # double-buffered bf16 A tile
    out_bufs = 2 * tm * f_out * 4         # double-buffered f32 output tile
    bias = 2 * f_out * 4
    return (resident + a_bufs + out_bufs + bias) < int(0.8 * limit_bytes)


# ----------------------------------------------------------------------------
# support = X @ W   (dense feature transform, bf16 lane-dense output)
# ----------------------------------------------------------------------------
def _transform_kernel(x_ref, w_ref, o_ref):
    o_ref[...] = jnp.dot(
        x_ref[...], w_ref[...], preferred_element_type=jnp.float32
    ).astype(o_ref.dtype)


def transform(x, w, *, tm, out_dtype=jnp.bfloat16):
    n, f_in = x.shape
    f_out = w.shape[1]
    assert n % tm == 0
    return pl.pallas_call(
        _transform_kernel,
        out_shape=jax.ShapeDtypeStruct((n, f_out), out_dtype),
        grid_spec=pltpu.PrefetchScalarGridSpec(
            num_scalar_prefetch=0,
            grid=(n // tm,),
            in_specs=[
                pl.BlockSpec((tm, f_in), lambda i: (i, 0)),     # X row tile
                pl.BlockSpec((f_in, f_out), lambda i: (0, 0)),  # W (resident)
            ],
            out_specs=pl.BlockSpec((tm, f_out), lambda i: (i, 0)),
        ),
        compiler_params=pltpu.CompilerParams(
            dimension_semantics=("parallel",),
            vmem_limit_bytes=_vmem_limit_bytes(),
        ),
    )(x, w)


# ----------------------------------------------------------------------------
# out = epilogue(A @ support + b)
#   epilogue = ReLU (layer 1)  or  log_softmax over the first `valid_cols`
#   columns (layer 2; padded class columns masked to -inf).
# Grid: (row tiles [parallel], K tiles over A columns [arbitrary, last]).
# Accumulates in f32 directly into the resident output tile (no scratch).
# ----------------------------------------------------------------------------
def _aggregate_kernel(a_ref, s_ref, b_ref, o_ref, *, mode, valid_cols,
                      resident, tk):
    k = pl.program_id(1)

    @pl.when(k == 0)
    def _():
        o_ref[...] = jnp.zeros_like(o_ref)

    if resident:
        off = pl.multiple_of(k * tk, tk)
        s_blk = s_ref[pl.ds(off, tk), :]
    else:
        s_blk = s_ref[...]

    o_ref[...] += jnp.dot(a_ref[...], s_blk, preferred_element_type=jnp.float32)

    @pl.when(k == pl.num_programs(1) - 1)
    def _():
        z = o_ref[...] + b_ref[...]
        if mode == "relu":
            out = jnp.maximum(z, 0.0)
        else:  # fused log_softmax epilogue (exp/log ride the otherwise-idle EUP)
            col = jax.lax.broadcasted_iota(jnp.int32, z.shape, 1)
            z = jnp.where(col < valid_cols, z, -jnp.inf)
            m = jnp.max(z, axis=1, keepdims=True)
            s = z - m
            lse = jnp.log(jnp.sum(jnp.exp(s), axis=1, keepdims=True))
            out = s - lse
        o_ref[...] = out.astype(o_ref.dtype)


def aggregate(a, support, b, *, tm, tk, mode, valid_cols=0):
    n_p = a.shape[0]
    f_out = support.shape[1]
    assert n_p % tm == 0 and n_p % tk == 0
    vmem_limit = _vmem_limit_bytes()
    resident = _support_fits_resident(n_p, f_out, tm, tk, vmem_limit)

    if resident:
        # Full support stays in VMEM; constant block index -> DMA'd once.
        s_spec = pl.BlockSpec((n_p, f_out), lambda i, k: (0, 0))
    else:
        # Fallback: stream the (tk, f_out) K-slab.
        s_spec = pl.BlockSpec((tk, f_out), lambda i, k: (k, 0))

    kernel = functools.partial(_aggregate_kernel, mode=mode,
                               valid_cols=valid_cols, resident=resident, tk=tk)
    return pl.pallas_call(
        kernel,
        out_shape=jax.ShapeDtypeStruct((n_p, f_out), jnp.float32),
        grid_spec=pltpu.PrefetchScalarGridSpec(
            num_scalar_prefetch=0,
            grid=(n_p // tm, n_p // tk),
            in_specs=[
                pl.BlockSpec((tm, tk), lambda i, k: (i, k)),     # A tile (bf16)
                s_spec,                                          # support (bf16)
                pl.BlockSpec((1, f_out), lambda i, k: (0, 0)),   # bias (f32)
            ],
            out_specs=pl.BlockSpec((tm, f_out), lambda i, k: (i, 0)),
        ),
        compiler_params=pltpu.CompilerParams(
            dimension_semantics=("parallel", "arbitrary"),
            vmem_limit_bytes=vmem_limit,
        ),
    )(a, support, b)


# ----------------------------------------------------------------------------
# One-time preprocessing + per-call forward
# ----------------------------------------------------------------------------
def gcn_prepare(a, x, params):
    """One-time padding / casting to kernel-friendly shapes.

    Call this ONCE (outside the per-step path): it copies the O(n^2) adjacency
    into a padded bf16 buffer that is then reused by every forward call.
    """
    w1, b1, w2, b2 = params
    n = a.shape[0]
    nfeat = x.shape[1]
    nhid = w1.shape[1]
    nclass = w2.shape[1]

    tm, tk, n_p = _choose_tiles(n)
    nfeat_p = _round_up(nfeat, 128)
    nhid_p = _round_up(nhid, 128)
    nclass_p = _round_up(nclass, 128)

    a_p = jnp.zeros((n_p, n_p), jnp.bfloat16).at[:n, :n].set(
        a.astype(jnp.bfloat16))
    x_p = jnp.zeros((n_p, nfeat_p), jnp.float32).at[:n, :nfeat].set(x)
    w1_p = jnp.zeros((nfeat_p, nhid_p), jnp.float32).at[:nfeat, :nhid].set(w1)
    b1_p = jnp.zeros((1, nhid_p), jnp.float32).at[0, :nhid].set(b1)
    w2_p = jnp.zeros((nhid_p, nclass_p), jnp.float32).at[:nhid, :nclass].set(w2)
    b2_p = jnp.zeros((1, nclass_p), jnp.float32).at[0, :nclass].set(b2)

    meta = dict(n=n, nclass=nclass, tm=tm, tk=tk)
    return (a_p, x_p, w1_p, b1_p, w2_p, b2_p), meta


def gcn_forward(padded, meta):
    a_p, x_p, w1_p, b1_p, w2_p, b2_p = padded
    tm, tk = meta["tm"], meta["tk"]
    n, nclass = meta["n"], meta["nclass"]

    s1 = transform(x_p, w1_p, tm=tm)                              # bf16 X @ W1
    h = aggregate(a_p, s1, b1_p, tm=tm, tk=tk, mode="relu")       # relu(A s1 + b1)
    # dropout: identity (inference)
    s2 = transform(h, w2_p, tm=tm)                                # bf16 h @ W2
    out = aggregate(a_p, s2, b2_p, tm=tm, tk=tk,
                    mode="log_softmax", valid_cols=nclass)        # log_softmax
    return out[:n, :nclass]


def init_gcn_params(key, nfeat, nhid, nclass):
    """Mirrors GraphConvolution.reset_parameters: uniform(-stdv, stdv)."""
    k1, k2, k3, k4 = jax.random.split(key, 4)
    stdv1 = 1.0 / math.sqrt(nhid)
    stdv2 = 1.0 / math.sqrt(nclass)
    w1 = jax.random.uniform(k1, (nfeat, nhid), jnp.float32, -stdv1, stdv1)
    b1 = jax.random.uniform(k2, (nhid,), jnp.float32, -stdv1, stdv1)
    w2 = jax.random.uniform(k3, (nhid, nclass), jnp.float32, -stdv2, stdv2)
    b2 = jax.random.uniform(k4, (nclass,), jnp.float32, -stdv2, stdv2)
    return w1, b1, w2, b2


if __name__ == "__main__":
    key = jax.random.PRNGKey(0)
    N, NFEAT, NHID, NCLASS = 64, 32, 32, 8

    k_adj, k_x, k_p = jax.random.split(key, 3)

    # Deterministic row-normalized adjacency with self loops.
    adj_raw = (jax.random.uniform(k_adj, (N, N)) > 0.8).astype(jnp.float32)
    adj_raw = adj_raw + jnp.eye(N, dtype=jnp.float32)
    a = adj_raw / jnp.sum(adj_raw, axis=1, keepdims=True)

    x = jax.random.normal(k_x, (N, NFEAT), jnp.float32)
    params = init_gcn_params(k_p, NFEAT, NHID, NCLASS)

    padded, meta = gcn_prepare(a, x, params)   # one-time pad + bf16 cast
    out = gcn_forward(padded, meta)
    jax.block_until_ready(out)

    # Sanity check against plain-JAX f32 reference (bf16 operands -> loosened tol).
    h_ref = jnp.maximum(a @ x @ params[0] + params[1], 0.0)
    z_ref = a @ h_ref @ params[2] + params[3]
    ref = jax.nn.log_softmax(z_ref, axis=1)
    assert out.shape == (N, NCLASS)
    assert jnp.allclose(out, ref, atol=3e-2, rtol=3e-2), float(
        jnp.max(jnp.abs(out - ref)))

    print("KERNEL_OK")
</pallas_src>

<mosaic_0001>
module attributes {stable_mosaic.version = 11 : i64} {
  func.func @_transform_kernel(%arg0: i32, %arg1: memref<64x128xf32, #tpu.memory_space<vmem>>, %arg2: memref<128x128xf32, #tpu.memory_space<vmem>>, %arg3: memref<64x128xbf16, #tpu.memory_space<vmem>>) attributes {dimension_semantics = [#tpu.dimension_semantics<parallel>], iteration_bounds = array<i64: 1>, scalar_prefetch = 0 : i64, scratch_operands = 0 : i64, tpu.core_type = #tpu.core_type<tc>, window_params = [{transform_indices = @transform_0, window_bounds = array<i64: 64, 128>}, {pipeline_mode = #tpu.pipeline_mode<synchronous>, transform_indices = @transform_1, window_bounds = array<i64: 128, 128>}, {transform_indices = @transform_2, window_bounds = array<i64: 64, 128>}]} {
    %c0 = arith.constant 0 : index
    %c0_0 = arith.constant 0 : index
    %0 = vector.load %arg1[%c0, %c0_0] : memref<64x128xf32, #tpu.memory_space<vmem>>, vector<64x128xf32>
    %c0_1 = arith.constant 0 : index
    %c0_2 = arith.constant 0 : index
    %1 = vector.load %arg2[%c0_1, %c0_2] : memref<128x128xf32, #tpu.memory_space<vmem>>, vector<128x128xf32>
    %cst = arith.constant dense<0.000000e+00> : vector<64x128xf32>
    %2 = tpu.matmul %0, %1, %cst {dimension_numbers = #tpu.dot_dimension_numbers<[1], [0], [0], [1], [0, 0, 1, 1], [], []>} : vector<64x128xf32>, vector<128x128xf32>, vector<64x128xf32> -> vector<64x128xf32>
    %3 = arith.truncf %2 : vector<64x128xf32> to vector<64x128xbf16>
    %c0_3 = arith.constant 0 : index
    %c0_4 = arith.constant 0 : index
    %4 = vector.load %arg3[%c0_3, %c0_4] : memref<64x128xbf16, #tpu.memory_space<vmem>>, vector<64x128xbf16>
    tpu.vector_store %arg3[%c0_3, %c0_4], %3 {strides = array<i32>} : memref<64x128xbf16, #tpu.memory_space<vmem>>, vector<64x128xbf16>,
    return
  }
  func.func @transform_0(%arg0: i32) -> (i32, i32) {
    %c0_i32 = arith.constant 0 : i32
    %c0_i32_0 = arith.constant 0 : i32
    return %arg0, %c0_i32 : i32, i32
  }
  func.func @transform_1(%arg0: i32) -> (i32, i32) {
    %c0_i32 = arith.constant 0 : i32
    %c0_i32_0 = arith.constant 0 : i32
    %c0_i32_1 = arith.constant 0 : i32
    return %c0_i32, %c0_i32_0 : i32, i32
  }
  func.func @transform_2(%arg0: i32) -> (i32, i32) {
    %c0_i32 = arith.constant 0 : i32
    %c0_i32_0 = arith.constant 0 : i32
    return %arg0, %c0_i32 : i32, i32
  }
}

</mosaic_0001>

<llo_original>
// kernel: tpu_custom_call.1
$region0: #{tpu_custom_call.1}
  #allocation0 [shape = 'u32[]', space=smem, size = 0x4, offset = 0x4, fixed_abs, tag = 'smem constant byte address 0x4 - core index']
  #allocation1 [shape = 'u32[144,128]{1,0:T(1,128)}', space=vmem, size = 0x12000, scoped, tag = 'internal scratch']
  %s0 = inlined_call_operand.hbm [shape: f32[64,128], index: 0, kind: input, shape index: {}]
  %s1 = inlined_call_operand.hbm [shape: f32[128,128], index: 1, kind: input, shape index: {}]
  %s2 = inlined_call_operand.hbm [shape: bf16[64,128], index: 2, kind: output, shape index: {}]
  %s3 = sld [smem:[#allocation0]]
  $region26: #{tpu_custom_call.1} parent=0
    _
  %s5 = ssub.s32 1, %s3
  %s6 = scalar_select 0, %s5, %s3
  $region1: #{tpu_custom_call.1} parent=0
    #allocation2 [shape = 'u8[32768]{0}', space=vmem, size = 0x8000, scoped, tag = 'input window, operand 0, single buffered']
    #allocation3 [shape = 's32[1]{0}', space=sflag, size = 0x4, scoped, tag = 'scoped memory for tpu_custom_call.1']
    #allocation4 [shape = 's32[1]{0}', space=sflag, size = 0x4, scoped, tag = 'scoped memory for tpu_custom_call.1']
    #allocation5 [shape = 'u8[65536]{0}', space=vmem, size = 0x10000, scoped, tag = 'input window, operand 1, single buffered']
    #allocation6 [shape = 's32[1]{0}', space=sflag, size = 0x4, scoped, tag = 'scoped memory for tpu_custom_call.1']
    #allocation7 [shape = 'u8[16384]{0}', space=vmem, size = 0x4000, scoped, tag = 'output window, operand 0, single buffered']
    %7 = vsyncpa [#allocation3], 0
    %8 = vsyncpa [#allocation6], 0
    %9 = vsyncpa [#allocation4], 0
    // Predicated region
    $region2: #{tpu_custom_call.1} parent=1 // pred_check
      _
    $region3: #{tpu_custom_call.1} parent=1 // pred_check_branch
      %11 = sbr.rel (0) target = $region5
    $region4: #{tpu_custom_call.1} parent=1 // pred_region
      %s13 = ssub.s32 1024, 1024
      %14 = vsyncadd [#allocation3], %s13
      %s15 = sshll.u32 [#allocation2], 4
      %s16 = int_to_ptr.vmem [resolvable:$true] %s15
      %21 = dma.hbm_to_vmem [thread:$0]  %s0, 1024, %s16, [#allocation3], 128, 128, 8
    $region5: #{tpu_custom_call.1} parent=1 // pred_fallthru
      _
    // Predicated region
    $region6: #{tpu_custom_call.1} parent=1 // pred_check
      _
    $region7: #{tpu_custom_call.1} parent=1 // pred_check_branch
      %23 = sbr.rel (0) target = $region9
    $region8: #{tpu_custom_call.1} parent=1 // pred_region
      %s25 = ssub.s32 2048, 2048
      %26 = vsyncadd [#allocation6], %s25
      %s27 = sshll.u32 [#allocation5], 4
      %s28 = int_to_ptr.vmem [resolvable:$true] %s27
      %33 = dma.hbm_to_vmem [thread:$0]  %s1, 2048, %s28, [#allocation6], 128, 128, 8
    $region9: #{tpu_custom_call.1} parent=1 // pred_fallthru
      _
    // Predicated region
    $region10: #{tpu_custom_call.1} parent=1 // pred_check
      _
    $region11: #{tpu_custom_call.1} parent=1 // pred_check_branch
      %35 = sbr.rel (0) target = $region13
    $region12: #{tpu_custom_call.1} parent=1 // pred_region
      %36 = dma.done [#allocation3], 1024
    $region13: #{tpu_custom_call.1} parent=1 // pred_fallthru
      _
    // Predicated region
    $region14: #{tpu_custom_call.1} parent=1 // pred_check
      _
    $region15: #{tpu_custom_call.1} parent=1 // pred_check_branch
      %38 = sbr.rel (0) target = $region17
    $region16: #{tpu_custom_call.1} parent=1 // pred_region
      %39 = dma.done [#allocation6], 2048
    $region17: #{tpu_custom_call.1} parent=1 // pred_fallthru
      _
    %v40 = vld [vmem:[#allocation2] sm:$0xff]
    %v41 = vld [vmem:[#allocation2 + $0x8] sm:$0xff]
    %v42 = vld [vmem:[#allocation2 + $0x10] sm:$0xff]
    %v43 = vld [vmem:[#allocation2 + $0x18] sm:$0xff]
    %v44 = vld [vmem:[#allocation2 + $0x20] sm:$0xff]
    %v45 = vld [vmem:[#allocation2 + $0x28] sm:$0xff]
    %v46 = vld [vmem:[#allocation2 + $0x30] sm:$0xff]
    %v47 = vld [vmem:[#allocation2 + $0x38] sm:$0xff]
    %v48 = vld [vmem:[#allocation5] sm:$0xff]
    %v49 = vld [vmem:[#allocation5 + $0x8] sm:$0xff]
    %v50 = vld [vmem:[#allocation5 + $0x10] sm:$0xff]
    %v51 = vld [vmem:[#allocation5 + $0x18] sm:$0xff]
    %v52 = vld [vmem:[#allocation5 + $0x20] sm:$0xff]
    %v53 = vld [vmem:[#allocation5 + $0x28] sm:$0xff]
    %v54 = vld [vmem:[#allocation5 + $0x30] sm:$0xff]
    %v55 = vld [vmem:[#allocation5 + $0x38] sm:$0xff]
    %v56 = vld [vmem:[#allocation5 + $0x40] sm:$0xff]
    %v57 = vld [vmem:[#allocation5 + $0x48] sm:$0xff]
    %v58 = vld [vmem:[#allocation5 + $0x50] sm:$0xff]
    %v59 = vld [vmem:[#allocation5 + $0x58] sm:$0xff]
    %v60 = vld [vmem:[#allocation5 + $0x60] sm:$0xff]
    %v61 = vld [vmem:[#allocation5 + $0x68] sm:$0xff]
    %v62 = vld [vmem:[#allocation5 + $0x70] sm:$0xff]
    %v63 = vld [vmem:[#allocation5 + $0x78] sm:$0xff]
    %64 = vmatprep.subr.mxu0 0.0
    %65 = vmatpush1.msra.mxu0 %v63
    %66 = vmatprep.subr.mxu0 0.0
    %67 = vmatpush1.msra.mxu0 %v62
    %68 = vmatprep.subr.mxu0 0.0
    %69 = vmatpush1.msra.mxu0 %v61
    %70 = vmatprep.subr.mxu0 0.0
    %71 = vmatpush1.msra.mxu0 %v60
    %72 = vmatprep.subr.mxu0 0.0
    %73 = vmatpush1.msra.mxu0 %v59
    %74 = vmatprep.subr.mxu0 0.0
    %75 = vmatpush1.msra.mxu0 %v58
    %76 = vmatprep.subr.mxu0 0.0
    %77 = vmatpush1.msra.mxu0 %v57
    %78 = vmatprep.subr.mxu0 0.0
    %79 = vmatpush1.msra.mxu0 %v56
    %80 = vmatprep.subr.mxu0 0.0
    %81 = vmatpush1.msra.mxu0 %v55
    %82 = vmatprep.subr.mxu0 0.0
    %83 = vmatpush1.msra.mxu0 %v54
    %84 = vmatprep.subr.mxu0 0.0
    %85 = vmatpush1.msra.mxu0 %v53
    %86 = vmatprep.subr.mxu0 0.0
    %87 = vmatpush1.msra.mxu0 %v52
    %88 = vmatprep.subr.mxu0 0.0
    %89 = vmatpush1.msra.mxu0 %v51
    %90 = vmatprep.subr.mxu0 0.0
    %91 = vmatpush1.msra.mxu0 %v50
    %92 = vmatprep.subr.mxu0 0.0
    %93 = vmatpush1.msra.mxu0 %v49
    %94 = vmatprep.subr.mxu0 0.0
    %95 = vmatpush1.msra.mxu0 %v48
    %96 = vmatprep.subr.mxu0 0.0
    %97 = vmatpush2.msra.mxu0 0.0
    %98 = vmatprep.subr.mxu0 0.0
    %99 = vmatpush2.msra.mxu0 0.0
    %100 = vmatprep.subr.mxu0 0.0
    %101 = vmatpush2.msra.mxu0 0.0
    %102 = vmatprep.subr.mxu0 0.0
    %103 = vmatpush2.msra.mxu0 0.0
    %104 = vmatprep.subr.mxu0 0.0
    %105 = vmatpush2.msra.mxu0 0.0
    %106 = vmatprep.subr.mxu0 0.0
    %107 = vmatpush2.msra.mxu0 0.0
    %108 = vmatprep.subr.mxu0 0.0
    %109 = vmatpush2.msra.mxu0 0.0
    %110 = vmatprep.subr.mxu0 0.0
    %111 = vmatpush2.msra.mxu0 0.0
    %112 = vmatprep.subr.mxu0 0.0
    %113 = vmatpush2.msra.mxu0 0.0
    %114 = vmatprep.subr.mxu0 0.0
    %115 = vmatpush2.msra.mxu0 0.0
    %116 = vmatprep.subr.mxu0 0.0
    %117 = vmatpush2.msra.mxu0 0.0
    %118 = vmatprep.subr.mxu0 0.0
    %119 = vmatpush2.msra.mxu0 0.0
    %120 = vmatprep.subr.mxu0 0.0
    %121 = vmatpush2.msra.mxu0 0.0
    %122 = vmatprep.subr.mxu0 0.0
    %123 = vmatpush2.msra.mxu0 0.0
    %124 = vmatprep.subr.mxu0 0.0
    %125 = vmatpush2.msra.mxu0 0.0
    %126 = vmatprep.subr.mxu0 0.0
    %127 = vmatpush2.msra.mxu0 0.0
    %128 = vmatprep.mubr.f32.mxu0 0.0
    %129 = vmatmul.mubr.f32.gmra.mxu0 %v40
    %v130 = vpop.f32.mrf.mxu0
    %v131 = vadd.f32 0.0, %v130
    %v132 = vpop.f32.mrf.mxu0
    %133 = vmatprep.mubr.f32.mxu0 0.0
    %134 = vmatmul.mubr.f32.gmra.mxu0 %v41
    %v135 = vpop.f32.mrf.mxu0
    %v136 = vadd.f32 0.0, %v135
    %v137 = vpop.f32.mrf.mxu0
    %138 = vmatprep.mubr.f32.mxu0 0.0
    %139 = vmatmul.mubr.f32.gmra.mxu0 %v42
    %v140 = vpop.f32.mrf.mxu0
    %v141 = vadd.f32 0.0, %v140
    %v142 = vpop.f32.mrf.mxu0
    %143 = vmatprep.mubr.f32.mxu0 0.0
    %144 = vmatmul.mubr.f32.gmra.mxu0 %v43
    %v145 = vpop.f32.mrf.mxu0
    %v146 = vadd.f32 0.0, %v145
    %v147 = vpop.f32.mrf.mxu0
    %148 = vmatprep.mubr.f32.mxu0 0.0
    %149 = vmatmul.mubr.f32.gmra.mxu0 %v44
    %v150 = vpop.f32.mrf.mxu0
    %v151 = vadd.f32 0.0, %v150
    %v152 = vpop.f32.mrf.mxu0
    %153 = vmatprep.mubr.f32.mxu0 0.0
    %154 = vmatmul.mubr.f32.gmra.mxu0 %v45
    %v155 = vpop.f32.mrf.mxu0
    %v156 = vadd.f32 0.0, %v155
    %v157 = vpop.f32.mrf.mxu0
    %158 = vmatprep.mubr.f32.mxu0 0.0
    %159 = vmatmul.mubr.f32.gmra.mxu0 %v46
    %v160 = vpop.f32.mrf.mxu0
    %v161 = vadd.f32 0.0, %v160
    %v162 = vpop.f32.mrf.mxu0
    %163 = vmatprep.mubr.f32.mxu0 0.0
    %164 = vmatmul.mubr.f32.gmra.mxu0 %v47
    %v165 = vpop.f32.mrf.mxu0
    %v166 = vadd.f32 0.0, %v165
    %v167 = vpop.f32.mrf.mxu0
    %168 = vdwg.mxu0
    %v169 = vpack.c.bf16 %v136, %v131
    %v170 = vpack.c.bf16 %v146, %v141
    %v171 = vpack.c.bf16 %v156, %v151
    %v172 = vpack.c.bf16 %v166, %v161
    %v177 = vunpack.c.l.b16 %v169
    %v178 = vunpack.c.h.b16 %v169
    %v179 = vunpack.c.l.b16 %v170
    %v180 = vunpack.c.h.b16 %v170
    %v181 = vunpack.c.l.b16 %v171
    %v182 = vunpack.c.h.b16 %v171
    %v183 = vunpack.c.l.b16 %v172
    %v184 = vunpack.c.h.b16 %v172
    %v185 = vpack.c.b16 %v177, %v177
    %v186 = vpack.c.b16 %v178, %v178
    %v187 = vpack.c.b16 %v179, %v179
    %v188 = vpack.c.b16 %v180, %v180
    %v189 = vpack.c.b16 %v181, %v181
    %v190 = vpack.c.b16 %v182, %v182
    %v191 = vpack.c.b16 %v183, %v183
    %v192 = vpack.c.b16 %v184, %v184
    %201 = vst [vmem:[#allocation7] sm:$0xf] %v185
    %202 = vst [vmem:[#allocation7 + $0x4] sm:$0xf] %v186
    %203 = vst [vmem:[#allocation7 + $0x8] sm:$0xf] %v187
    %204 = vst [vmem:[#allocation7 + $0xc] sm:$0xf] %v188
    %205 = vst [vmem:[#allocation7 + $0x10] sm:$0xf] %v189
    %206 = vst [vmem:[#allocation7 + $0x14] sm:$0xf] %v190
    %207 = vst [vmem:[#allocation7 + $0x18] sm:$0xf] %v191
    %208 = vst [vmem:[#allocation7 + $0x1c] sm:$0xf] %v192
    // Predicated region
    $region18: #{tpu_custom_call.1} parent=1 // pred_check
      _
    $region19: #{tpu_custom_call.1} parent=1 // pred_check_branch
      %210 = sbr.rel (0) target = $region21
    $region20: #{tpu_custom_call.1} parent=1 // pred_region
      %s212 = ssub.s32 512, 512
      %213 = vsyncadd [#allocation4], %s212
      %s214 = sshll.u32 [#allocation7], 4
      %s215 = int_to_ptr.vmem [resolvable:$true] %s214
      %220 = dma.vmem_to_hbm [thread:$0]  %s215, 512, %s2, [#allocation4], 64, 64, 4
    $region21: #{tpu_custom_call.1} parent=1 // pred_fallthru
      _
    // Predicated region
    $region22: #{tpu_custom_call.1} parent=1 // pred_check
      _
    $region23: #{tpu_custom_call.1} parent=1 // pred_check_branch
      %222 = sbr.rel (0) target = $region25
    $region24: #{tpu_custom_call.1} parent=1 // pred_region
      %223 = dma.done [#allocation4], 512
    $region25: #{tpu_custom_call.1} parent=1 // pred_fallthru
      _
    %224 = vsyncpa [#allocation3], 1
    %225 = vsyncpa [#allocation6], 1
    %226 = vsyncpa [#allocation4], 1

</llo_original>
